<compile_context>
chip_gen: v5e
topology: v5e:2x2
jax: 0.10.0
libtpu: 0.0.40
codegen_flags: <defaults>
</compile_context>

<pallas_src>
import functools

import jax
import jax.numpy as jnp
from jax.experimental import pallas as pl
from jax.experimental.pallas import tpu as pltpu


def _embed_ln_kernel(ids_ref, word_ref, pos_ref, gamma_ref, beta_ref, out_ref,
                     gbuf, sems, *, eps, e_real, tile_r, group, n_groups):
    """One grid step processes `tile_r` flattened (batch*seq) token rows.

    word_ref lives in HBM (memory_space=pl.ANY).  Rows are gathered with manual
    per-row async copies, double-buffered in groups of `group` rows so the next
    group's DMAs overlap the current group's pos-add + LayerNorm compute.
    """
    tile_idx = pl.program_id(0)
    row_base = tile_idx * tile_r

    def issue_group(g, slot):
        base = row_base + g * group
        for r in range(group):                      # static unroll: `group` copies in flight
            tok = ids_ref[base + r]
            pltpu.make_async_copy(
                word_ref.at[pl.ds(tok, 1), :],
                gbuf.at[slot, pl.ds(r, 1), :],
                sems.at[slot, r],
            ).start()

    def wait_group(slot):
        for r in range(group):
            pltpu.make_async_copy(
                word_ref.at[pl.ds(0, 1), :],
                gbuf.at[slot, pl.ds(r, 1), :],
                sems.at[slot, r],
            ).wait()

    # Prime the pipeline with the first gather group.
    issue_group(0, 0)

    # Hoist loop-invariant loads out of the group loop (no per-iter re-broadcast).
    gamma = gamma_ref[...].astype(jnp.float32)      # (1, E_pad)
    beta = beta_ref[...].astype(jnp.float32)        # (1, E_pad)
    inv_e = jnp.float32(1.0 / e_real)
    eps_f = jnp.float32(eps)

    @pl.loop(0, n_groups)
    def _(g):
        slot = g & 1

        # Keep the next group's row copies in flight while we compute this one.
        @pl.when(g + 1 < n_groups)
        def _():
            issue_group(g + 1, 1 - slot)

        wait_group(slot)

        off = pl.multiple_of(g * group, group)
        x = gbuf[slot].astype(jnp.float32) + pos_ref[pl.ds(off, group), :].astype(jnp.float32)

        # One-pass LayerNorm stats over the real (unpadded) embedding width; padded
        # lanes are zero in both tables so they do not perturb the sums.
        s1 = jnp.sum(x, axis=-1, keepdims=True)
        s2 = jnp.sum(x * x, axis=-1, keepdims=True)
        mean = s1 * inv_e
        var = jnp.maximum(s2 * inv_e - mean * mean, 0.0)
        inv = jax.lax.rsqrt(var + eps_f)
        y = (x - mean) * inv * gamma + beta
        out_ref[pl.ds(off, group), :] = y.astype(out_ref.dtype)


def _pick_tile_rows(seq_len, max_tile=512):
    """Largest divisor of seq_len <= max_tile, preferring multiples of 8 (sublane-aligned)."""
    divisors = [d for d in range(1, min(seq_len, max_tile) + 1) if seq_len % d == 0]
    mult8 = [d for d in divisors if d % 8 == 0]
    return max(mult8) if mult8 else max(divisors)


def transformer_embeddings(ids, word_table, pos_table, gamma, beta, *, eps=1e-5):
    """Pallas implementation of TransformerEmbeddings.forward (eval mode)."""
    B, S = ids.shape
    V, E = word_table.shape
    max_len = pos_table.shape[0]
    assert S == max_len, "original module's broadcast requires seq_len == max_length"

    rows = B * S
    E_pad = ((E + 127) // 128) * 128               # lane-dense (multiple-of-128) stores

    wt = word_table.astype(jnp.float32)
    pt = pos_table.astype(jnp.float32)
    g2 = gamma.reshape(1, E).astype(jnp.float32)
    b2 = beta.reshape(1, E).astype(jnp.float32)
    if E_pad != E:
        pad = ((0, 0), (0, E_pad - E))
        wt, pt, g2, b2 = (jnp.pad(a, pad) for a in (wt, pt, g2, b2))

    TILE_R = _pick_tile_rows(S)                    # rows per grid step; divides S (and rows)
    if TILE_R % 8 != 0 and TILE_R != rows:
        raise ValueError(f"cannot pick an 8-aligned row tile for seq_len={S}")
    GROUP = next(c for c in (32, 16, 8, TILE_R) if TILE_R % c == 0)
    n_groups = TILE_R // GROUP
    n_tiles = rows // TILE_R
    n_pos_blocks = S // TILE_R

    ids_flat = ids.reshape(rows).astype(jnp.int32)

    grid_spec = pltpu.PrefetchScalarGridSpec(
        num_scalar_prefetch=1,                     # ids land in SMEM for the in-kernel gather
        grid=(n_tiles,),
        in_specs=[
            pl.BlockSpec(memory_space=pl.ANY),                                    # word table (HBM)
            pl.BlockSpec((TILE_R, E_pad), lambda i, ids: (i % n_pos_blocks, 0)),  # pos tile
            pl.BlockSpec((1, E_pad), lambda i, ids: (0, 0)),                      # gamma
            pl.BlockSpec((1, E_pad), lambda i, ids: (0, 0)),                      # beta
        ],
        out_specs=pl.BlockSpec((TILE_R, E_pad), lambda i, ids: (i, 0)),
        scratch_shapes=[
            pltpu.VMEM((2, GROUP, E_pad), jnp.float32),      # double-buffered gather buffer
            pltpu.SemaphoreType.DMA((2, GROUP)),
        ],
    )

    # VMEM budget: double-buffered pos + out tiles, gather scratch, gamma/beta; clamp to
    # stay comfortably inside v7x's 64 MiB physical VMEM.
    vmem_bytes = 4 * TILE_R * E_pad * 4 + 2 * GROUP * E_pad * 4 + 4 * E_pad * 4
    vmem_limit = int(min(max(2 * vmem_bytes, 16 * 1024 * 1024), 64 * 1024 * 1024))

    out_flat = pl.pallas_call(
        functools.partial(
            _embed_ln_kernel, eps=float(eps), e_real=E,
            tile_r=TILE_R, group=GROUP, n_groups=n_groups,
        ),
        out_shape=jax.ShapeDtypeStruct((rows, E_pad), jnp.float32),
        grid_spec=grid_spec,
        compiler_params=pltpu.CompilerParams(
            dimension_semantics=("parallel",),     # independent row tiles (2 TCs on v7x)
            vmem_limit_bytes=vmem_limit,
        ),
    )(ids_flat, wt, pt, g2, b2)

    if E_pad != E:
        out_flat = out_flat[:, :E]
    return out_flat.reshape(B, S, E)


def reference(ids, word_table, pos_table, gamma, beta, eps=1e-5):
    """Pure-JAX reference matching the PyTorch forward (eval mode)."""
    we = word_table[ids]                           # (B, S, E)
    pe = pos_table[None, :, :]                     # (1, max_len, E); broadcasts since S == max_len
    x = we + pe
    mean = x.mean(-1, keepdims=True)
    var = ((x - mean) ** 2).mean(-1, keepdims=True)
    return (x - mean) / jnp.sqrt(var + eps) * gamma + beta


if __name__ == "__main__":
    # Small, module-consistent shapes.
    vocab_size = 64
    max_length = 8
    embed_size = 32
    batch = 2
    seq = max_length                               # required by the original broadcast semantics
    eps = 1e-5

    key = jax.random.PRNGKey(0)
    k_word, k_pos, k_ids = jax.random.split(key, 3)

    # Deterministic parameter init (PyTorch defaults: Embedding ~ N(0,1), LN weight=1, bias=0).
    word_table = jax.random.normal(k_word, (vocab_size, embed_size), dtype=jnp.float32)
    pos_table = jax.random.normal(k_pos, (max_length, embed_size), dtype=jnp.float32)
    gamma = jnp.ones((embed_size,), dtype=jnp.float32)
    beta = jnp.zeros((embed_size,), dtype=jnp.float32)

    x = jax.random.randint(k_ids, (batch, seq), 0, vocab_size, dtype=jnp.int32)

    out = transformer_embeddings(x, word_table, pos_table, gamma, beta, eps=eps)
    out = jax.block_until_ready(out)

    ref = reference(x, word_table, pos_table, gamma, beta, eps=eps)
    assert out.shape == (batch, seq, embed_size)
    assert jnp.allclose(out, ref, atol=2e-5, rtol=2e-5), "mismatch vs. pure-JAX reference"

    print("KERNEL_OK")
</pallas_src>

<mosaic_0001>
module attributes {stable_mosaic.version = 11 : i64} {
  func.func @_embed_ln_kernel(%arg0: i32, %arg1: memref<16xi32, #tpu.memory_space<smem>>, %arg2: memref<64x128xf32, #tpu.memory_space<any>>, %arg3: memref<8x128xf32, #tpu.memory_space<vmem>>, %arg4: memref<1x128xf32, #tpu.memory_space<vmem>>, %arg5: memref<1x128xf32, #tpu.memory_space<vmem>>, %arg6: memref<8x128xf32, #tpu.memory_space<vmem>>, %arg7: memref<2x8x128xf32, #tpu.memory_space<vmem>>, %arg8: memref<2x8x!tpu.dma_semaphore, #tpu.memory_space<semaphore_mem>>) attributes {dimension_semantics = [#tpu.dimension_semantics<parallel>], iteration_bounds = array<i64: 2>, scalar_prefetch = 1 : i64, scratch_operands = 2 : i64, tpu.core_type = #tpu.core_type<tc>, window_params = [{}, {transform_indices = @transform_1, window_bounds = array<i64: 8, 128>}, {pipeline_mode = #tpu.pipeline_mode<synchronous>, transform_indices = @transform_2, window_bounds = array<i64: 1, 128>}, {pipeline_mode = #tpu.pipeline_mode<synchronous>, transform_indices = @transform_3, window_bounds = array<i64: 1, 128>}, {transform_indices = @transform_4, window_bounds = array<i64: 8, 128>}]} {
    %c8_i32 = arith.constant 8 : i32
    %0 = arith.muli %arg0, %c8_i32 : i32
    %c0_i32 = arith.constant 0 : i32
    %1 = arith.addi %0, %c0_i32 : i32
    %c0_i32_0 = arith.constant 0 : i32
    %2 = arith.addi %1, %c0_i32_0 : i32
    %3 = arith.index_cast %2 : i32 to index
    %4 = memref.load %arg1[%3] : memref<16xi32, #tpu.memory_space<smem>>
    %c0_i32_1 = arith.constant 0 : i32
    %c0_i32_2 = arith.constant 0 : i32
    %c0_i32_3 = arith.constant 0 : i32
    %c0_i32_4 = arith.constant 0 : i32
    %5 = tpu.memref_slice %arg2[%4, %c0_i32_4] : memref<64x128xf32, #tpu.memory_space<any>> -> memref<1x128xf32, #tpu.memory_space<any>>
    %c0_i32_5 = arith.constant 0 : i32
    %c0_i32_6 = arith.constant 0 : i32
    %6 = tpu.memref_slice %arg7[%c0_i32_1, %c0_i32_5, %c0_i32_6] : memref<2x8x128xf32, #tpu.memory_space<vmem>> -> memref<1x1x128xf32, #tpu.memory_space<vmem>>
    %7 = tpu.memref_squeeze %6 : memref<1x1x128xf32, #tpu.memory_space<vmem>> -> memref<1x128xf32, #tpu.memory_space<vmem>>
    %8 = tpu.memref_slice %arg8[%c0_i32_2, %c0_i32_3] : memref<2x8x!tpu.dma_semaphore, #tpu.memory_space<semaphore_mem>> -> memref<1x1x!tpu.dma_semaphore, #tpu.memory_space<semaphore_mem>>
    %9 = tpu.memref_squeeze %8 : memref<1x1x!tpu.dma_semaphore, #tpu.memory_space<semaphore_mem>> -> memref<!tpu.dma_semaphore, #tpu.memory_space<semaphore_mem>>
    tpu.enqueue_dma source(%5 : memref<1x128xf32, #tpu.memory_space<any>>) target(%7 : memref<1x128xf32, #tpu.memory_space<vmem>>) target_semaphore(%9 : memref<!tpu.dma_semaphore, #tpu.memory_space<semaphore_mem>>)
    %c1_i32 = arith.constant 1 : i32
    %10 = arith.addi %1, %c1_i32 : i32
    %11 = arith.index_cast %10 : i32 to index
    %12 = memref.load %arg1[%11] : memref<16xi32, #tpu.memory_space<smem>>
    %c0_i32_7 = arith.constant 0 : i32
    %c0_i32_8 = arith.constant 0 : i32
    %c1_i32_9 = arith.constant 1 : i32
    %c0_i32_10 = arith.constant 0 : i32
    %13 = tpu.memref_slice %arg2[%12, %c0_i32_10] : memref<64x128xf32, #tpu.memory_space<any>> -> memref<1x128xf32, #tpu.memory_space<any>>
    %c1_i32_11 = arith.constant 1 : i32
    %c0_i32_12 = arith.constant 0 : i32
    %14 = tpu.memref_slice %arg7[%c0_i32_7, %c1_i32_11, %c0_i32_12] : memref<2x8x128xf32, #tpu.memory_space<vmem>> -> memref<1x1x128xf32, #tpu.memory_space<vmem>>
    %15 = tpu.memref_squeeze %14 : memref<1x1x128xf32, #tpu.memory_space<vmem>> -> memref<1x128xf32, #tpu.memory_space<vmem>>
    %16 = tpu.memref_slice %arg8[%c0_i32_8, %c1_i32_9] : memref<2x8x!tpu.dma_semaphore, #tpu.memory_space<semaphore_mem>> -> memref<1x1x!tpu.dma_semaphore, #tpu.memory_space<semaphore_mem>>
    %17 = tpu.memref_squeeze %16 : memref<1x1x!tpu.dma_semaphore, #tpu.memory_space<semaphore_mem>> -> memref<!tpu.dma_semaphore, #tpu.memory_space<semaphore_mem>>
    tpu.enqueue_dma source(%13 : memref<1x128xf32, #tpu.memory_space<any>>) target(%15 : memref<1x128xf32, #tpu.memory_space<vmem>>) target_semaphore(%17 : memref<!tpu.dma_semaphore, #tpu.memory_space<semaphore_mem>>)
    %c2_i32 = arith.constant 2 : i32
    %18 = arith.addi %1, %c2_i32 : i32
    %19 = arith.index_cast %18 : i32 to index
    %20 = memref.load %arg1[%19] : memref<16xi32, #tpu.memory_space<smem>>
    %c0_i32_13 = arith.constant 0 : i32
    %c0_i32_14 = arith.constant 0 : i32
    %c2_i32_15 = arith.constant 2 : i32
    %c0_i32_16 = arith.constant 0 : i32
    %21 = tpu.memref_slice %arg2[%20, %c0_i32_16] : memref<64x128xf32, #tpu.memory_space<any>> -> memref<1x128xf32, #tpu.memory_space<any>>
    %c2_i32_17 = arith.constant 2 : i32
    %c0_i32_18 = arith.constant 0 : i32
    %22 = tpu.memref_slice %arg7[%c0_i32_13, %c2_i32_17, %c0_i32_18] : memref<2x8x128xf32, #tpu.memory_space<vmem>> -> memref<1x1x128xf32, #tpu.memory_space<vmem>>
    %23 = tpu.memref_squeeze %22 : memref<1x1x128xf32, #tpu.memory_space<vmem>> -> memref<1x128xf32, #tpu.memory_space<vmem>>
    %24 = tpu.memref_slice %arg8[%c0_i32_14, %c2_i32_15] : memref<2x8x!tpu.dma_semaphore, #tpu.memory_space<semaphore_mem>> -> memref<1x1x!tpu.dma_semaphore, #tpu.memory_space<semaphore_mem>>
    %25 = tpu.memref_squeeze %24 : memref<1x1x!tpu.dma_semaphore, #tpu.memory_space<semaphore_mem>> -> memref<!tpu.dma_semaphore, #tpu.memory_space<semaphore_mem>>
    tpu.enqueue_dma source(%21 : memref<1x128xf32, #tpu.memory_space<any>>) target(%23 : memref<1x128xf32, #tpu.memory_space<vmem>>) target_semaphore(%25 : memref<!tpu.dma_semaphore, #tpu.memory_space<semaphore_mem>>)
    %c3_i32 = arith.constant 3 : i32
    %26 = arith.addi %1, %c3_i32 : i32
    %27 = arith.index_cast %26 : i32 to index
    %28 = memref.load %arg1[%27] : memref<16xi32, #tpu.memory_space<smem>>
    %c0_i32_19 = arith.constant 0 : i32
    %c0_i32_20 = arith.constant 0 : i32
    %c3_i32_21 = arith.constant 3 : i32
    %c0_i32_22 = arith.constant 0 : i32
    %29 = tpu.memref_slice %arg2[%28, %c0_i32_22] : memref<64x128xf32, #tpu.memory_space<any>> -> memref<1x128xf32, #tpu.memory_space<any>>
    %c3_i32_23 = arith.constant 3 : i32
    %c0_i32_24 = arith.constant 0 : i32
    %30 = tpu.memref_slice %arg7[%c0_i32_19, %c3_i32_23, %c0_i32_24] : memref<2x8x128xf32, #tpu.memory_space<vmem>> -> memref<1x1x128xf32, #tpu.memory_space<vmem>>
    %31 = tpu.memref_squeeze %30 : memref<1x1x128xf32, #tpu.memory_space<vmem>> -> memref<1x128xf32, #tpu.memory_space<vmem>>
    %32 = tpu.memref_slice %arg8[%c0_i32_20, %c3_i32_21] : memref<2x8x!tpu.dma_semaphore, #tpu.memory_space<semaphore_mem>> -> memref<1x1x!tpu.dma_semaphore, #tpu.memory_space<semaphore_mem>>
    %33 = tpu.memref_squeeze %32 : memref<1x1x!tpu.dma_semaphore, #tpu.memory_space<semaphore_mem>> -> memref<!tpu.dma_semaphore, #tpu.memory_space<semaphore_mem>>
    tpu.enqueue_dma source(%29 : memref<1x128xf32, #tpu.memory_space<any>>) target(%31 : memref<1x128xf32, #tpu.memory_space<vmem>>) target_semaphore(%33 : memref<!tpu.dma_semaphore, #tpu.memory_space<semaphore_mem>>)
    %c4_i32 = arith.constant 4 : i32
    %34 = arith.addi %1, %c4_i32 : i32
    %35 = arith.index_cast %34 : i32 to index
    %36 = memref.load %arg1[%35] : memref<16xi32, #tpu.memory_space<smem>>
    %c0_i32_25 = arith.constant 0 : i32
    %c0_i32_26 = arith.constant 0 : i32
    %c4_i32_27 = arith.constant 4 : i32
    %c0_i32_28 = arith.constant 0 : i32
    %37 = tpu.memref_slice %arg2[%36, %c0_i32_28] : memref<64x128xf32, #tpu.memory_space<any>> -> memref<1x128xf32, #tpu.memory_space<any>>
    %c4_i32_29 = arith.constant 4 : i32
    %c0_i32_30 = arith.constant 0 : i32
    %38 = tpu.memref_slice %arg7[%c0_i32_25, %c4_i32_29, %c0_i32_30] : memref<2x8x128xf32, #tpu.memory_space<vmem>> -> memref<1x1x128xf32, #tpu.memory_space<vmem>>
    %39 = tpu.memref_squeeze %38 : memref<1x1x128xf32, #tpu.memory_space<vmem>> -> memref<1x128xf32, #tpu.memory_space<vmem>>
    %40 = tpu.memref_slice %arg8[%c0_i32_26, %c4_i32_27] : memref<2x8x!tpu.dma_semaphore, #tpu.memory_space<semaphore_mem>> -> memref<1x1x!tpu.dma_semaphore, #tpu.memory_space<semaphore_mem>>
    %41 = tpu.memref_squeeze %40 : memref<1x1x!tpu.dma_semaphore, #tpu.memory_space<semaphore_mem>> -> memref<!tpu.dma_semaphore, #tpu.memory_space<semaphore_mem>>
    tpu.enqueue_dma source(%37 : memref<1x128xf32, #tpu.memory_space<any>>) target(%39 : memref<1x128xf32, #tpu.memory_space<vmem>>) target_semaphore(%41 : memref<!tpu.dma_semaphore, #tpu.memory_space<semaphore_mem>>)
    %c5_i32 = arith.constant 5 : i32
    %42 = arith.addi %1, %c5_i32 : i32
    %43 = arith.index_cast %42 : i32 to index
    %44 = memref.load %arg1[%43] : memref<16xi32, #tpu.memory_space<smem>>
    %c0_i32_31 = arith.constant 0 : i32
    %c0_i32_32 = arith.constant 0 : i32
    %c5_i32_33 = arith.constant 5 : i32
    %c0_i32_34 = arith.constant 0 : i32
    %45 = tpu.memref_slice %arg2[%44, %c0_i32_34] : memref<64x128xf32, #tpu.memory_space<any>> -> memref<1x128xf32, #tpu.memory_space<any>>
    %c5_i32_35 = arith.constant 5 : i32
    %c0_i32_36 = arith.constant 0 : i32
    %46 = tpu.memref_slice %arg7[%c0_i32_31, %c5_i32_35, %c0_i32_36] : memref<2x8x128xf32, #tpu.memory_space<vmem>> -> memref<1x1x128xf32, #tpu.memory_space<vmem>>
    %47 = tpu.memref_squeeze %46 : memref<1x1x128xf32, #tpu.memory_space<vmem>> -> memref<1x128xf32, #tpu.memory_space<vmem>>
    %48 = tpu.memref_slice %arg8[%c0_i32_32, %c5_i32_33] : memref<2x8x!tpu.dma_semaphore, #tpu.memory_space<semaphore_mem>> -> memref<1x1x!tpu.dma_semaphore, #tpu.memory_space<semaphore_mem>>
    %49 = tpu.memref_squeeze %48 : memref<1x1x!tpu.dma_semaphore, #tpu.memory_space<semaphore_mem>> -> memref<!tpu.dma_semaphore, #tpu.memory_space<semaphore_mem>>
    tpu.enqueue_dma source(%45 : memref<1x128xf32, #tpu.memory_space<any>>) target(%47 : memref<1x128xf32, #tpu.memory_space<vmem>>) target_semaphore(%49 : memref<!tpu.dma_semaphore, #tpu.memory_space<semaphore_mem>>)
    %c6_i32 = arith.constant 6 : i32
    %50 = arith.addi %1, %c6_i32 : i32
    %51 = arith.index_cast %50 : i32 to index
    %52 = memref.load %arg1[%51] : memref<16xi32, #tpu.memory_space<smem>>
    %c0_i32_37 = arith.constant 0 : i32
    %c0_i32_38 = arith.constant 0 : i32
    %c6_i32_39 = arith.constant 6 : i32
    %c0_i32_40 = arith.constant 0 : i32
    %53 = tpu.memref_slice %arg2[%52, %c0_i32_40] : memref<64x128xf32, #tpu.memory_space<any>> -> memref<1x128xf32, #tpu.memory_space<any>>
    %c6_i32_41 = arith.constant 6 : i32
    %c0_i32_42 = arith.constant 0 : i32
    %54 = tpu.memref_slice %arg7[%c0_i32_37, %c6_i32_41, %c0_i32_42] : memref<2x8x128xf32, #tpu.memory_space<vmem>> -> memref<1x1x128xf32, #tpu.memory_space<vmem>>
    %55 = tpu.memref_squeeze %54 : memref<1x1x128xf32, #tpu.memory_space<vmem>> -> memref<1x128xf32, #tpu.memory_space<vmem>>
    %56 = tpu.memref_slice %arg8[%c0_i32_38, %c6_i32_39] : memref<2x8x!tpu.dma_semaphore, #tpu.memory_space<semaphore_mem>> -> memref<1x1x!tpu.dma_semaphore, #tpu.memory_space<semaphore_mem>>
    %57 = tpu.memref_squeeze %56 : memref<1x1x!tpu.dma_semaphore, #tpu.memory_space<semaphore_mem>> -> memref<!tpu.dma_semaphore, #tpu.memory_space<semaphore_mem>>
    tpu.enqueue_dma source(%53 : memref<1x128xf32, #tpu.memory_space<any>>) target(%55 : memref<1x128xf32, #tpu.memory_space<vmem>>) target_semaphore(%57 : memref<!tpu.dma_semaphore, #tpu.memory_space<semaphore_mem>>)
    %c7_i32 = arith.constant 7 : i32
    %58 = arith.addi %1, %c7_i32 : i32
    %59 = arith.index_cast %58 : i32 to index
    %60 = memref.load %arg1[%59] : memref<16xi32, #tpu.memory_space<smem>>
    %c0_i32_43 = arith.constant 0 : i32
    %c0_i32_44 = arith.constant 0 : i32
    %c7_i32_45 = arith.constant 7 : i32
    %c0_i32_46 = arith.constant 0 : i32
    %61 = tpu.memref_slice %arg2[%60, %c0_i32_46] : memref<64x128xf32, #tpu.memory_space<any>> -> memref<1x128xf32, #tpu.memory_space<any>>
    %c7_i32_47 = arith.constant 7 : i32
    %c0_i32_48 = arith.constant 0 : i32
    %62 = tpu.memref_slice %arg7[%c0_i32_43, %c7_i32_47, %c0_i32_48] : memref<2x8x128xf32, #tpu.memory_space<vmem>> -> memref<1x1x128xf32, #tpu.memory_space<vmem>>
    %63 = tpu.memref_squeeze %62 : memref<1x1x128xf32, #tpu.memory_space<vmem>> -> memref<1x128xf32, #tpu.memory_space<vmem>>
    %64 = tpu.memref_slice %arg8[%c0_i32_44, %c7_i32_45] : memref<2x8x!tpu.dma_semaphore, #tpu.memory_space<semaphore_mem>> -> memref<1x1x!tpu.dma_semaphore, #tpu.memory_space<semaphore_mem>>
    %65 = tpu.memref_squeeze %64 : memref<1x1x!tpu.dma_semaphore, #tpu.memory_space<semaphore_mem>> -> memref<!tpu.dma_semaphore, #tpu.memory_space<semaphore_mem>>
    tpu.enqueue_dma source(%61 : memref<1x128xf32, #tpu.memory_space<any>>) target(%63 : memref<1x128xf32, #tpu.memory_space<vmem>>) target_semaphore(%65 : memref<!tpu.dma_semaphore, #tpu.memory_space<semaphore_mem>>)
    %c0 = arith.constant 0 : index
    %c0_49 = arith.constant 0 : index
    %66 = vector.load %arg4[%c0, %c0_49] : memref<1x128xf32, #tpu.memory_space<vmem>>, vector<1x128xf32>
    %c0_50 = arith.constant 0 : index
    %c0_51 = arith.constant 0 : index
    %67 = vector.load %arg5[%c0_50, %c0_51] : memref<1x128xf32, #tpu.memory_space<vmem>>, vector<1x128xf32>
    %cst = arith.constant 3.125000e-02 : f32
    %cst_52 = arith.constant 9.99999974E-6 : f32
    %c0_i32_53 = arith.constant 0 : i32
    %c1_i32_54 = arith.constant 1 : i32
    %68 = arith.muli %c0_i32_53, %c1_i32_54 : i32
    %c0_i32_55 = arith.constant 0 : i32
    %69 = arith.addi %c0_i32_55, %68 : i32
    %c1_i32_56 = arith.constant 1 : i32
    %70 = arith.andi %69, %c1_i32_56 : i32
    %c1_i32_57 = arith.constant 1 : i32
    %71 = arith.addi %69, %c1_i32_57 : i32
    %c1_i32_58 = arith.constant 1 : i32
    %72 = arith.cmpi slt, %71, %c1_i32_58 : i32
    %73 = arith.extui %72 : i1 to i32
    %c0_i32_59 = arith.constant 0 : i32
    %74 = arith.cmpi ne, %73, %c0_i32_59 : i32
    scf.if %74 {
      %c1_i32_109 = arith.constant 1 : i32
      %149 = arith.addi %69, %c1_i32_109 : i32
      %c1_i32_110 = arith.constant 1 : i32
      %150 = arith.subi %c1_i32_110, %70 : i32
      %c8_i32_111 = arith.constant 8 : i32
      %151 = arith.muli %149, %c8_i32_111 : i32
      %152 = arith.addi %0, %151 : i32
      %c0_i32_112 = arith.constant 0 : i32
      %153 = arith.addi %152, %c0_i32_112 : i32
      %154 = arith.index_cast %153 : i32 to index
      %155 = memref.load %arg1[%154] : memref<16xi32, #tpu.memory_space<smem>>
      %c0_i32_113 = arith.constant 0 : i32
      %c0_i32_114 = arith.constant 0 : i32
      %156 = tpu.memref_slice %arg2[%155, %c0_i32_114] : memref<64x128xf32, #tpu.memory_space<any>> -> memref<1x128xf32, #tpu.memory_space<any>>
      %c0_i32_115 = arith.constant 0 : i32
      %c0_i32_116 = arith.constant 0 : i32
      %157 = tpu.memref_slice %arg7[%150, %c0_i32_115, %c0_i32_116] : memref<2x8x128xf32, #tpu.memory_space<vmem>> -> memref<1x1x128xf32, #tpu.memory_space<vmem>>
      %158 = tpu.memref_squeeze %157 : memref<1x1x128xf32, #tpu.memory_space<vmem>> -> memref<1x128xf32, #tpu.memory_space<vmem>>
      %159 = tpu.memref_slice %arg8[%150, %c0_i32_113] : memref<2x8x!tpu.dma_semaphore, #tpu.memory_space<semaphore_mem>> -> memref<1x1x!tpu.dma_semaphore, #tpu.memory_space<semaphore_mem>>
      %160 = tpu.memref_squeeze %159 : memref<1x1x!tpu.dma_semaphore, #tpu.memory_space<semaphore_mem>> -> memref<!tpu.dma_semaphore, #tpu.memory_space<semaphore_mem>>
      tpu.enqueue_dma source(%156 : memref<1x128xf32, #tpu.memory_space<any>>) target(%158 : memref<1x128xf32, #tpu.memory_space<vmem>>) target_semaphore(%160 : memref<!tpu.dma_semaphore, #tpu.memory_space<semaphore_mem>>)
      %c1_i32_117 = arith.constant 1 : i32
      %161 = arith.addi %152, %c1_i32_117 : i32
      %162 = arith.index_cast %161 : i32 to index
      %163 = memref.load %arg1[%162] : memref<16xi32, #tpu.memory_space<smem>>
      %c1_i32_118 = arith.constant 1 : i32
      %c0_i32_119 = arith.constant 0 : i32
      %164 = tpu.memref_slice %arg2[%163, %c0_i32_119] : memref<64x128xf32, #tpu.memory_space<any>> -> memref<1x128xf32, #tpu.memory_space<any>>
      %c1_i32_120 = arith.constant 1 : i32
      %c0_i32_121 = arith.constant 0 : i32
      %165 = tpu.memref_slice %arg7[%150, %c1_i32_120, %c0_i32_121] : memref<2x8x128xf32, #tpu.memory_space<vmem>> -> memref<1x1x128xf32, #tpu.memory_space<vmem>>
      %166 = tpu.memref_squeeze %165 : memref<1x1x128xf32, #tpu.memory_space<vmem>> -> memref<1x128xf32, #tpu.memory_space<vmem>>
      %167 = tpu.memref_slice %arg8[%150, %c1_i32_118] : memref<2x8x!tpu.dma_semaphore, #tpu.memory_space<semaphore_mem>> -> memref<1x1x!tpu.dma_semaphore, #tpu.memory_space<semaphore_mem>>
      %168 = tpu.memref_squeeze %167 : memref<1x1x!tpu.dma_semaphore, #tpu.memory_space<semaphore_mem>> -> memref<!tpu.dma_semaphore, #tpu.memory_space<semaphore_mem>>
      tpu.enqueue_dma source(%164 : memref<1x128xf32, #tpu.memory_space<any>>) target(%166 : memref<1x128xf32, #tpu.memory_space<vmem>>) target_semaphore(%168 : memref<!tpu.dma_semaphore, #tpu.memory_space<semaphore_mem>>)
      %c2_i32_122 = arith.constant 2 : i32
      %169 = arith.addi %152, %c2_i32_122 : i32
      %170 = arith.index_cast %169 : i32 to index
      %171 = memref.load %arg1[%170] : memref<16xi32, #tpu.memory_space<smem>>
      %c2_i32_123 = arith.constant 2 : i32
      %c0_i32_124 = arith.constant 0 : i32
      %172 = tpu.memref_slice %arg2[%171, %c0_i32_124] : memref<64x128xf32, #tpu.memory_space<any>> -> memref<1x128xf32, #tpu.memory_space<any>>
      %c2_i32_125 = arith.constant 2 : i32
      %c0_i32_126 = arith.constant 0 : i32
      %173 = tpu.memref_slice %arg7[%150, %c2_i32_125, %c0_i32_126] : memref<2x8x128xf32, #tpu.memory_space<vmem>> -> memref<1x1x128xf32, #tpu.memory_space<vmem>>
      %174 = tpu.memref_squeeze %173 : memref<1x1x128xf32, #tpu.memory_space<vmem>> -> memref<1x128xf32, #tpu.memory_space<vmem>>
      %175 = tpu.memref_slice %arg8[%150, %c2_i32_123] : memref<2x8x!tpu.dma_semaphore, #tpu.memory_space<semaphore_mem>> -> memref<1x1x!tpu.dma_semaphore, #tpu.memory_space<semaphore_mem>>
      %176 = tpu.memref_squeeze %175 : memref<1x1x!tpu.dma_semaphore, #tpu.memory_space<semaphore_mem>> -> memref<!tpu.dma_semaphore, #tpu.memory_space<semaphore_mem>>
      tpu.enqueue_dma source(%172 : memref<1x128xf32, #tpu.memory_space<any>>) target(%174 : memref<1x128xf32, #tpu.memory_space<vmem>>) target_semaphore(%176 : memref<!tpu.dma_semaphore, #tpu.memory_space<semaphore_mem>>)
      %c3_i32_127 = arith.constant 3 : i32
      %177 = arith.addi %152, %c3_i32_127 : i32
      %178 = arith.index_cast %177 : i32 to index
      %179 = memref.load %arg1[%178] : memref<16xi32, #tpu.memory_space<smem>>
      %c3_i32_128 = arith.constant 3 : i32
      %c0_i32_129 = arith.constant 0 : i32
      %180 = tpu.memref_slice %arg2[%179, %c0_i32_129] : memref<64x128xf32, #tpu.memory_space<any>> -> memref<1x128xf32, #tpu.memory_space<any>>
      %c3_i32_130 = arith.constant 3 : i32
      %c0_i32_131 = arith.constant 0 : i32
      %181 = tpu.memref_slice %arg7[%150, %c3_i32_130, %c0_i32_131] : memref<2x8x128xf32, #tpu.memory_space<vmem>> -> memref<1x1x128xf32, #tpu.memory_space<vmem>>
      %182 = tpu.memref_squeeze %181 : memref<1x1x128xf32, #tpu.memory_space<vmem>> -> memref<1x128xf32, #tpu.memory_space<vmem>>
      %183 = tpu.memref_slice %arg8[%150, %c3_i32_128] : memref<2x8x!tpu.dma_semaphore, #tpu.memory_space<semaphore_mem>> -> memref<1x1x!tpu.dma_semaphore, #tpu.memory_space<semaphore_mem>>
      %184 = tpu.memref_squeeze %183 : memref<1x1x!tpu.dma_semaphore, #tpu.memory_space<semaphore_mem>> -> memref<!tpu.dma_semaphore, #tpu.memory_space<semaphore_mem>>
      tpu.enqueue_dma source(%180 : memref<1x128xf32, #tpu.memory_space<any>>) target(%182 : memref<1x128xf32, #tpu.memory_space<vmem>>) target_semaphore(%184 : memref<!tpu.dma_semaphore, #tpu.memory_space<semaphore_mem>>)
      %c4_i32_132 = arith.constant 4 : i32
      %185 = arith.addi %152, %c4_i32_132 : i32
      %186 = arith.index_cast %185 : i32 to index
      %187 = memref.load %arg1[%186] : memref<16xi32, #tpu.memory_space<smem>>
      %c4_i32_133 = arith.constant 4 : i32
      %c0_i32_134 = arith.constant 0 : i32
      %188 = tpu.memref_slice %arg2[%187, %c0_i32_134] : memref<64x128xf32, #tpu.memory_space<any>> -> memref<1x128xf32, #tpu.memory_space<any>>
      %c4_i32_135 = arith.constant 4 : i32
      %c0_i32_136 = arith.constant 0 : i32
      %189 = tpu.memref_slice %arg7[%150, %c4_i32_135, %c0_i32_136] : memref<2x8x128xf32, #tpu.memory_space<vmem>> -> memref<1x1x128xf32, #tpu.memory_space<vmem>>
      %190 = tpu.memref_squeeze %189 : memref<1x1x128xf32, #tpu.memory_space<vmem>> -> memref<1x128xf32, #tpu.memory_space<vmem>>
      %191 = tpu.memref_slice %arg8[%150, %c4_i32_133] : memref<2x8x!tpu.dma_semaphore, #tpu.memory_space<semaphore_mem>> -> memref<1x1x!tpu.dma_semaphore, #tpu.memory_space<semaphore_mem>>
      %192 = tpu.memref_squeeze %191 : memref<1x1x!tpu.dma_semaphore, #tpu.memory_space<semaphore_mem>> -> memref<!tpu.dma_semaphore, #tpu.memory_space<semaphore_mem>>
      tpu.enqueue_dma source(%188 : memref<1x128xf32, #tpu.memory_space<any>>) target(%190 : memref<1x128xf32, #tpu.memory_space<vmem>>) target_semaphore(%192 : memref<!tpu.dma_semaphore, #tpu.memory_space<semaphore_mem>>)
      %c5_i32_137 = arith.constant 5 : i32
      %193 = arith.addi %152, %c5_i32_137 : i32
      %194 = arith.index_cast %193 : i32 to index
      %195 = memref.load %arg1[%194] : memref<16xi32, #tpu.memory_space<smem>>
      %c5_i32_138 = arith.constant 5 : i32
      %c0_i32_139 = arith.constant 0 : i32
      %196 = tpu.memref_slice %arg2[%195, %c0_i32_139] : memref<64x128xf32, #tpu.memory_space<any>> -> memref<1x128xf32, #tpu.memory_space<any>>
      %c5_i32_140 = arith.constant 5 : i32
      %c0_i32_141 = arith.constant 0 : i32
      %197 = tpu.memref_slice %arg7[%150, %c5_i32_140, %c0_i32_141] : memref<2x8x128xf32, #tpu.memory_space<vmem>> -> memref<1x1x128xf32, #tpu.memory_space<vmem>>
      %198 = tpu.memref_squeeze %197 : memref<1x1x128xf32, #tpu.memory_space<vmem>> -> memref<1x128xf32, #tpu.memory_space<vmem>>
      %199 = tpu.memref_slice %arg8[%150, %c5_i32_138] : memref<2x8x!tpu.dma_semaphore, #tpu.memory_space<semaphore_mem>> -> memref<1x1x!tpu.dma_semaphore, #tpu.memory_space<semaphore_mem>>
      %200 = tpu.memref_squeeze %199 : memref<1x1x!tpu.dma_semaphore, #tpu.memory_space<semaphore_mem>> -> memref<!tpu.dma_semaphore, #tpu.memory_space<semaphore_mem>>
      tpu.enqueue_dma source(%196 : memref<1x128xf32, #tpu.memory_space<any>>) target(%198 : memref<1x128xf32, #tpu.memory_space<vmem>>) target_semaphore(%200 : memref<!tpu.dma_semaphore, #tpu.memory_space<semaphore_mem>>)
      %c6_i32_142 = arith.constant 6 : i32
      %201 = arith.addi %152, %c6_i32_142 : i32
      %202 = arith.index_cast %201 : i32 to index
      %203 = memref.load %arg1[%202] : memref<16xi32, #tpu.memory_space<smem>>
      %c6_i32_143 = arith.constant 6 : i32
      %c0_i32_144 = arith.constant 0 : i32
      %204 = tpu.memref_slice %arg2[%203, %c0_i32_144] : memref<64x128xf32, #tpu.memory_space<any>> -> memref<1x128xf32, #tpu.memory_space<any>>
      %c6_i32_145 = arith.constant 6 : i32
      %c0_i32_146 = arith.constant 0 : i32
      %205 = tpu.memref_slice %arg7[%150, %c6_i32_145, %c0_i32_146] : memref<2x8x128xf32, #tpu.memory_space<vmem>> -> memref<1x1x128xf32, #tpu.memory_space<vmem>>
      %206 = tpu.memref_squeeze %205 : memref<1x1x128xf32, #tpu.memory_space<vmem>> -> memref<1x128xf32, #tpu.memory_space<vmem>>
      %207 = tpu.memref_slice %arg8[%150, %c6_i32_143] : memref<2x8x!tpu.dma_semaphore, #tpu.memory_space<semaphore_mem>> -> memref<1x1x!tpu.dma_semaphore, #tpu.memory_space<semaphore_mem>>
      %208 = tpu.memref_squeeze %207 : memref<1x1x!tpu.dma_semaphore, #tpu.memory_space<semaphore_mem>> -> memref<!tpu.dma_semaphore, #tpu.memory_space<semaphore_mem>>
      tpu.enqueue_dma source(%204 : memref<1x128xf32, #tpu.memory_space<any>>) target(%206 : memref<1x128xf32, #tpu.memory_space<vmem>>) target_semaphore(%208 : memref<!tpu.dma_semaphore, #tpu.memory_space<semaphore_mem>>)
      %c7_i32_147 = arith.constant 7 : i32
      %209 = arith.addi %152, %c7_i32_147 : i32
      %210 = arith.index_cast %209 : i32 to index
      %211 = memref.load %arg1[%210] : memref<16xi32, #tpu.memory_space<smem>>
      %c7_i32_148 = arith.constant 7 : i32
      %c0_i32_149 = arith.constant 0 : i32
      %212 = tpu.memref_slice %arg2[%211, %c0_i32_149] : memref<64x128xf32, #tpu.memory_space<any>> -> memref<1x128xf32, #tpu.memory_space<any>>
      %c7_i32_150 = arith.constant 7 : i32
      %c0_i32_151 = arith.constant 0 : i32
      %213 = tpu.memref_slice %arg7[%150, %c7_i32_150, %c0_i32_151] : memref<2x8x128xf32, #tpu.memory_space<vmem>> -> memref<1x1x128xf32, #tpu.memory_space<vmem>>
      %214 = tpu.memref_squeeze %213 : memref<1x1x128xf32, #tpu.memory_space<vmem>> -> memref<1x128xf32, #tpu.memory_space<vmem>>
      %215 = tpu.memref_slice %arg8[%150, %c7_i32_148] : memref<2x8x!tpu.dma_semaphore, #tpu.memory_space<semaphore_mem>> -> memref<1x1x!tpu.dma_semaphore, #tpu.memory_space<semaphore_mem>>
      %216 = tpu.memref_squeeze %215 : memref<1x1x!tpu.dma_semaphore, #tpu.memory_space<semaphore_mem>> -> memref<!tpu.dma_semaphore, #tpu.memory_space<semaphore_mem>>
      tpu.enqueue_dma source(%212 : memref<1x128xf32, #tpu.memory_space<any>>) target(%214 : memref<1x128xf32, #tpu.memory_space<vmem>>) target_semaphore(%216 : memref<!tpu.dma_semaphore, #tpu.memory_space<semaphore_mem>>)
    } else {
    }
    %c0_i32_60 = arith.constant 0 : i32
    %c0_i32_61 = arith.constant 0 : i32
    %c0_i32_62 = arith.constant 0 : i32
    %75 = tpu.memref_slice %arg2[%c0_i32_61, %c0_i32_62] : memref<64x128xf32, #tpu.memory_space<any>> -> memref<1x128xf32, #tpu.memory_space<any>>
    %c0_i32_63 = arith.constant 0 : i32
    %c0_i32_64 = arith.constant 0 : i32
    %76 = tpu.memref_slice %arg7[%70, %c0_i32_63, %c0_i32_64] : memref<2x8x128xf32, #tpu.memory_space<vmem>> -> memref<1x1x128xf32, #tpu.memory_space<vmem>>
    %77 = tpu.memref_squeeze %76 : memref<1x1x128xf32, #tpu.memory_space<vmem>> -> memref<1x128xf32, #tpu.memory_space<vmem>>
    %78 = tpu.memref_slice %arg8[%70, %c0_i32_60] : memref<2x8x!tpu.dma_semaphore, #tpu.memory_space<semaphore_mem>> -> memref<1x1x!tpu.dma_semaphore, #tpu.memory_space<semaphore_mem>>
    %79 = tpu.memref_squeeze %78 : memref<1x1x!tpu.dma_semaphore, #tpu.memory_space<semaphore_mem>> -> memref<!tpu.dma_semaphore, #tpu.memory_space<semaphore_mem>>
    tpu.wait_dma2 semaphore(%79 : memref<!tpu.dma_semaphore, #tpu.memory_space<semaphore_mem>>) src(%75 : memref<1x128xf32, #tpu.memory_space<any>>) dst(%77 : memref<1x128xf32, #tpu.memory_space<vmem>>)
    %c1_i32_65 = arith.constant 1 : i32
    %c0_i32_66 = arith.constant 0 : i32
    %c0_i32_67 = arith.constant 0 : i32
    %80 = tpu.memref_slice %arg2[%c0_i32_66, %c0_i32_67] : memref<64x128xf32, #tpu.memory_space<any>> -> memref<1x128xf32, #tpu.memory_space<any>>
    %c1_i32_68 = arith.constant 1 : i32
    %c0_i32_69 = arith.constant 0 : i32
    %81 = tpu.memref_slice %arg7[%70, %c1_i32_68, %c0_i32_69] : memref<2x8x128xf32, #tpu.memory_space<vmem>> -> memref<1x1x128xf32, #tpu.memory_space<vmem>>
    %82 = tpu.memref_squeeze %81 : memref<1x1x128xf32, #tpu.memory_space<vmem>> -> memref<1x128xf32, #tpu.memory_space<vmem>>
    %83 = tpu.memref_slice %arg8[%70, %c1_i32_65] : memref<2x8x!tpu.dma_semaphore, #tpu.memory_space<semaphore_mem>> -> memref<1x1x!tpu.dma_semaphore, #tpu.memory_space<semaphore_mem>>
    %84 = tpu.memref_squeeze %83 : memref<1x1x!tpu.dma_semaphore, #tpu.memory_space<semaphore_mem>> -> memref<!tpu.dma_semaphore, #tpu.memory_space<semaphore_mem>>
    tpu.wait_dma2 semaphore(%84 : memref<!tpu.dma_semaphore, #tpu.memory_space<semaphore_mem>>) src(%80 : memref<1x128xf32, #tpu.memory_space<any>>) dst(%82 : memref<1x128xf32, #tpu.memory_space<vmem>>)
    %c2_i32_70 = arith.constant 2 : i32
    %c0_i32_71 = arith.constant 0 : i32
    %c0_i32_72 = arith.constant 0 : i32
    %85 = tpu.memref_slice %arg2[%c0_i32_71, %c0_i32_72] : memref<64x128xf32, #tpu.memory_space<any>> -> memref<1x128xf32, #tpu.memory_space<any>>
    %c2_i32_73 = arith.constant 2 : i32
    %c0_i32_74 = arith.constant 0 : i32
    %86 = tpu.memref_slice %arg7[%70, %c2_i32_73, %c0_i32_74] : memref<2x8x128xf32, #tpu.memory_space<vmem>> -> memref<1x1x128xf32, #tpu.memory_space<vmem>>
    %87 = tpu.memref_squeeze %86 : memref<1x1x128xf32, #tpu.memory_space<vmem>> -> memref<1x128xf32, #tpu.memory_space<vmem>>
    %88 = tpu.memref_slice %arg8[%70, %c2_i32_70] : memref<2x8x!tpu.dma_semaphore, #tpu.memory_space<semaphore_mem>> -> memref<1x1x!tpu.dma_semaphore, #tpu.memory_space<semaphore_mem>>
    %89 = tpu.memref_squeeze %88 : memref<1x1x!tpu.dma_semaphore, #tpu.memory_space<semaphore_mem>> -> memref<!tpu.dma_semaphore, #tpu.memory_space<semaphore_mem>>
    tpu.wait_dma2 semaphore(%89 : memref<!tpu.dma_semaphore, #tpu.memory_space<semaphore_mem>>) src(%85 : memref<1x128xf32, #tpu.memory_space<any>>) dst(%87 : memref<1x128xf32, #tpu.memory_space<vmem>>)
    %c3_i32_75 = arith.constant 3 : i32
    %c0_i32_76 = arith.constant 0 : i32
    %c0_i32_77 = arith.constant 0 : i32
    %90 = tpu.memref_slice %arg2[%c0_i32_76, %c0_i32_77] : memref<64x128xf32, #tpu.memory_space<any>> -> memref<1x128xf32, #tpu.memory_space<any>>
    %c3_i32_78 = arith.constant 3 : i32
    %c0_i32_79 = arith.constant 0 : i32
    %91 = tpu.memref_slice %arg7[%70, %c3_i32_78, %c0_i32_79] : memref<2x8x128xf32, #tpu.memory_space<vmem>> -> memref<1x1x128xf32, #tpu.memory_space<vmem>>
    %92 = tpu.memref_squeeze %91 : memref<1x1x128xf32, #tpu.memory_space<vmem>> -> memref<1x128xf32, #tpu.memory_space<vmem>>
    %93 = tpu.memref_slice %arg8[%70, %c3_i32_75] : memref<2x8x!tpu.dma_semaphore, #tpu.memory_space<semaphore_mem>> -> memref<1x1x!tpu.dma_semaphore, #tpu.memory_space<semaphore_mem>>
    %94 = tpu.memref_squeeze %93 : memref<1x1x!tpu.dma_semaphore, #tpu.memory_space<semaphore_mem>> -> memref<!tpu.dma_semaphore, #tpu.memory_space<semaphore_mem>>
    tpu.wait_dma2 semaphore(%94 : memref<!tpu.dma_semaphore, #tpu.memory_space<semaphore_mem>>) src(%90 : memref<1x128xf32, #tpu.memory_space<any>>) dst(%92 : memref<1x128xf32, #tpu.memory_space<vmem>>)
    %c4_i32_80 = arith.constant 4 : i32
    %c0_i32_81 = arith.constant 0 : i32
    %c0_i32_82 = arith.constant 0 : i32
    %95 = tpu.memref_slice %arg2[%c0_i32_81, %c0_i32_82] : memref<64x128xf32, #tpu.memory_space<any>> -> memref<1x128xf32, #tpu.memory_space<any>>
    %c4_i32_83 = arith.constant 4 : i32
    %c0_i32_84 = arith.constant 0 : i32
    %96 = tpu.memref_slice %arg7[%70, %c4_i32_83, %c0_i32_84] : memref<2x8x128xf32, #tpu.memory_space<vmem>> -> memref<1x1x128xf32, #tpu.memory_space<vmem>>
    %97 = tpu.memref_squeeze %96 : memref<1x1x128xf32, #tpu.memory_space<vmem>> -> memref<1x128xf32, #tpu.memory_space<vmem>>
    %98 = tpu.memref_slice %arg8[%70, %c4_i32_80] : memref<2x8x!tpu.dma_semaphore, #tpu.memory_space<semaphore_mem>> -> memref<1x1x!tpu.dma_semaphore, #tpu.memory_space<semaphore_mem>>
    %99 = tpu.memref_squeeze %98 : memref<1x1x!tpu.dma_semaphore, #tpu.memory_space<semaphore_mem>> -> memref<!tpu.dma_semaphore, #tpu.memory_space<semaphore_mem>>
    tpu.wait_dma2 semaphore(%99 : memref<!tpu.dma_semaphore, #tpu.memory_space<semaphore_mem>>) src(%95 : memref<1x128xf32, #tpu.memory_space<any>>) dst(%97 : memref<1x128xf32, #tpu.memory_space<vmem>>)
    %c5_i32_85 = arith.constant 5 : i32
    %c0_i32_86 = arith.constant 0 : i32
    %c0_i32_87 = arith.constant 0 : i32
    %100 = tpu.memref_slice %arg2[%c0_i32_86, %c0_i32_87] : memref<64x128xf32, #tpu.memory_space<any>> -> memref<1x128xf32, #tpu.memory_space<any>>
    %c5_i32_88 = arith.constant 5 : i32
    %c0_i32_89 = arith.constant 0 : i32
    %101 = tpu.memref_slice %arg7[%70, %c5_i32_88, %c0_i32_89] : memref<2x8x128xf32, #tpu.memory_space<vmem>> -> memref<1x1x128xf32, #tpu.memory_space<vmem>>
    %102 = tpu.memref_squeeze %101 : memref<1x1x128xf32, #tpu.memory_space<vmem>> -> memref<1x128xf32, #tpu.memory_space<vmem>>
    %103 = tpu.memref_slice %arg8[%70, %c5_i32_85] : memref<2x8x!tpu.dma_semaphore, #tpu.memory_space<semaphore_mem>> -> memref<1x1x!tpu.dma_semaphore, #tpu.memory_space<semaphore_mem>>
    %104 = tpu.memref_squeeze %103 : memref<1x1x!tpu.dma_semaphore, #tpu.memory_space<semaphore_mem>> -> memref<!tpu.dma_semaphore, #tpu.memory_space<semaphore_mem>>
    tpu.wait_dma2 semaphore(%104 : memref<!tpu.dma_semaphore, #tpu.memory_space<semaphore_mem>>) src(%100 : memref<1x128xf32, #tpu.memory_space<any>>) dst(%102 : memref<1x128xf32, #tpu.memory_space<vmem>>)
    %c6_i32_90 = arith.constant 6 : i32
    %c0_i32_91 = arith.constant 0 : i32
    %c0_i32_92 = arith.constant 0 : i32
    %105 = tpu.memref_slice %arg2[%c0_i32_91, %c0_i32_92] : memref<64x128xf32, #tpu.memory_space<any>> -> memref<1x128xf32, #tpu.memory_space<any>>
    %c6_i32_93 = arith.constant 6 : i32
    %c0_i32_94 = arith.constant 0 : i32
    %106 = tpu.memref_slice %arg7[%70, %c6_i32_93, %c0_i32_94] : memref<2x8x128xf32, #tpu.memory_space<vmem>> -> memref<1x1x128xf32, #tpu.memory_space<vmem>>
    %107 = tpu.memref_squeeze %106 : memref<1x1x128xf32, #tpu.memory_space<vmem>> -> memref<1x128xf32, #tpu.memory_space<vmem>>
    %108 = tpu.memref_slice %arg8[%70, %c6_i32_90] : memref<2x8x!tpu.dma_semaphore, #tpu.memory_space<semaphore_mem>> -> memref<1x1x!tpu.dma_semaphore, #tpu.memory_space<semaphore_mem>>
    %109 = tpu.memref_squeeze %108 : memref<1x1x!tpu.dma_semaphore, #tpu.memory_space<semaphore_mem>> -> memref<!tpu.dma_semaphore, #tpu.memory_space<semaphore_mem>>
    tpu.wait_dma2 semaphore(%109 : memref<!tpu.dma_semaphore, #tpu.memory_space<semaphore_mem>>) src(%105 : memref<1x128xf32, #tpu.memory_space<any>>) dst(%107 : memref<1x128xf32, #tpu.memory_space<vmem>>)
    %c7_i32_95 = arith.constant 7 : i32
    %c0_i32_96 = arith.constant 0 : i32
    %c0_i32_97 = arith.constant 0 : i32
    %110 = tpu.memref_slice %arg2[%c0_i32_96, %c0_i32_97] : memref<64x128xf32, #tpu.memory_space<any>> -> memref<1x128xf32, #tpu.memory_space<any>>
    %c7_i32_98 = arith.constant 7 : i32
    %c0_i32_99 = arith.constant 0 : i32
    %111 = tpu.memref_slice %arg7[%70, %c7_i32_98, %c0_i32_99] : memref<2x8x128xf32, #tpu.memory_space<vmem>> -> memref<1x1x128xf32, #tpu.memory_space<vmem>>
    %112 = tpu.memref_squeeze %111 : memref<1x1x128xf32, #tpu.memory_space<vmem>> -> memref<1x128xf32, #tpu.memory_space<vmem>>
    %113 = tpu.memref_slice %arg8[%70, %c7_i32_95] : memref<2x8x!tpu.dma_semaphore, #tpu.memory_space<semaphore_mem>> -> memref<1x1x!tpu.dma_semaphore, #tpu.memory_space<semaphore_mem>>
    %114 = tpu.memref_squeeze %113 : memref<1x1x!tpu.dma_semaphore, #tpu.memory_space<semaphore_mem>> -> memref<!tpu.dma_semaphore, #tpu.memory_space<semaphore_mem>>
    tpu.wait_dma2 semaphore(%114 : memref<!tpu.dma_semaphore, #tpu.memory_space<semaphore_mem>>) src(%110 : memref<1x128xf32, #tpu.memory_space<any>>) dst(%112 : memref<1x128xf32, #tpu.memory_space<vmem>>)
    %c8_i32_100 = arith.constant 8 : i32
    %115 = arith.muli %69, %c8_i32_100 : i32
    %116 = tpu.assume_multiple %115, 8 : i32
    %117 = arith.index_cast %70 : i32 to index
    %c0_101 = arith.constant 0 : index
    %c0_102 = arith.constant 0 : index
    %118 = vector.load %arg7[%117, %c0_101, %c0_102] : memref<2x8x128xf32, #tpu.memory_space<vmem>>, vector<1x8x128xf32>
    %119 = vector.shape_cast %118 : vector<1x8x128xf32> to vector<8x128xf32>
    %120 = arith.index_cast %116 : i32 to index
    %c0_103 = arith.constant 0 : index
    %121 = vector.load %arg3[%120, %c0_103] : memref<8x128xf32, #tpu.memory_space<vmem>>, vector<8x128xf32>
    %122 = arith.addf %119, %121 : vector<8x128xf32>
    %cst_104 = arith.constant dense<0.000000e+00> : vector<8xf32>
    %123 = vector.multi_reduction <add>, %122, %cst_104 [1] : vector<8x128xf32> to vector<8xf32>
    %124 = vector.shape_cast %123 : vector<8xf32> to vector<8x1xf32>
    %125 = arith.mulf %122, %122 : vector<8x128xf32>
    %cst_105 = arith.constant dense<0.000000e+00> : vector<8xf32>
    %126 = vector.multi_reduction <add>, %125, %cst_105 [1] : vector<8x128xf32> to vector<8xf32>
    %127 = vector.shape_cast %126 : vector<8xf32> to vector<8x1xf32>
    %128 = vector.broadcast %cst : f32 to vector<8x1xf32>
    %129 = arith.mulf %124, %128 : vector<8x1xf32>
    %130 = vector.broadcast %cst : f32 to vector<8x1xf32>
    %131 = arith.mulf %127, %130 : vector<8x1xf32>
    %132 = arith.mulf %129, %129 : vector<8x1xf32>
    %133 = arith.subf %131, %132 : vector<8x1xf32>
    %cst_106 = arith.constant 0.000000e+00 : f32
    %134 = vector.broadcast %cst_106 : f32 to vector<8x1xf32>
    %135 = arith.maximumf %133, %134 : vector<8x1xf32>
    %136 = vector.broadcast %cst_52 : f32 to vector<8x1xf32>
    %137 = arith.addf %135, %136 : vector<8x1xf32>
    %138 = math.rsqrt %137 : vector<8x1xf32>
    %139 = vector.broadcast %129 : vector<8x1xf32> to vector<8x128xf32>
    %140 = arith.subf %122, %139 : vector<8x128xf32>
    %141 = vector.broadcast %138 : vector<8x1xf32> to vector<8x128xf32>
    %142 = arith.mulf %140, %141 : vector<8x128xf32>
    %143 = vector.broadcast %66 : vector<1x128xf32> to vector<8x128xf32>
    %144 = arith.mulf %142, %143 : vector<8x128xf32>
    %145 = vector.broadcast %67 : vector<1x128xf32> to vector<8x128xf32>
    %146 = arith.addf %144, %145 : vector<8x128xf32>
    %147 = arith.index_cast %116 : i32 to index
    %c0_107 = arith.constant 0 : index
    %148 = vector.load %arg6[%147, %c0_107] : memref<8x128xf32, #tpu.memory_space<vmem>>, vector<8x128xf32>
    tpu.vector_store %arg6[%147, %c0_107], %146 {strides = array<i32>} : memref<8x128xf32, #tpu.memory_space<vmem>>, vector<8x128xf32>,
    %c1_i32_108 = arith.constant 1 : i32
    return
  }
  func.func @transform_1(%arg0: i32, %arg1: memref<16xi32, #tpu.memory_space<smem>>) -> (i32, i32) {
    %c1_i32 = arith.constant 1 : i32
    %c0_i32 = arith.constant 0 : i32
    %0 = arith.cmpi eq, %c1_i32, %c0_i32 : i32
    %c1_i32_0 = arith.constant 1 : i32
    %1 = arith.select %0, %c1_i32_0, %c1_i32 : i32
    %2 = arith.remsi %arg0, %1 : i32
    %c0_i32_1 = arith.constant 0 : i32
    %3 = arith.cmpi ne, %2, %c0_i32_1 : i32
    %c0_i32_2 = arith.constant 0 : i32
    %4 = arith.cmpi slt, %2, %c0_i32_2 : i32
    %c0_i32_3 = arith.constant 0 : i32
    %5 = arith.cmpi slt, %1, %c0_i32_3 : i32
    %6 = arith.xori %4, %5 : i1
    %7 = arith.andi %6, %3 : i1
    %8 = arith.addi %2, %1 : i32
    %9 = arith.select %7, %8, %2 : i32
    %c0_i32_4 = arith.constant 0 : i32
    %c0_i32_5 = arith.constant 0 : i32
    return %9, %c0_i32_4 : i32, i32
  }
  func.func @transform_2(%arg0: i32, %arg1: memref<16xi32, #tpu.memory_space<smem>>) -> (i32, i32) {
    %c0_i32 = arith.constant 0 : i32
    %c0_i32_0 = arith.constant 0 : i32
    %c0_i32_1 = arith.constant 0 : i32
    return %c0_i32, %c0_i32_0 : i32, i32
  }
  func.func @transform_3(%arg0: i32, %arg1: memref<16xi32, #tpu.memory_space<smem>>) -> (i32, i32) {
    %c0_i32 = arith.constant 0 : i32
    %c0_i32_0 = arith.constant 0 : i32
    %c0_i32_1 = arith.constant 0 : i32
    return %c0_i32, %c0_i32_0 : i32, i32
  }
  func.func @transform_4(%arg0: i32, %arg1: memref<16xi32, #tpu.memory_space<smem>>) -> (i32, i32) {
    %c0_i32 = arith.constant 0 : i32
    %c0_i32_0 = arith.constant 0 : i32
    return %arg0, %c0_i32 : i32, i32
  }
}

</mosaic_0001>

<llo_original>
// kernel: tpu_custom_call.1
$region0: #{tpu_custom_call.1}
  #allocation0 [shape = 'u32[]', space=smem, size = 0x4, offset = 0x4, fixed_abs, tag = 'smem constant byte address 0x4 - core index']
  #allocation1 [shape = 'u32[72,128]{1,0:T(1,128)}', space=vmem, size = 0x9000, scoped, tag = 'internal scratch']
  #allocation2 [shape = 'f32[2,8,128]{2,1,0:T(8,128)}', space=vmem, size = 0x2000, scoped, tag = 'scratch operand']
  #allocation3 [shape = 's32[16]{0}', space=sflag, size = 0x40, scoped, tag = 'scratch operand']
  #allocation4 [shape = 's32[1]{0}', space=sflag, size = 0x4, scoped, tag = 'scoped memory for tpu_custom_call.1']
  #allocation5 [shape = 'u8[512]{0}', space=smem, size = 0x200, scoped, tag = 'prefetched SMEM operand 0']
  #allocation10 [shape = 's32[]', space=sflag, size = 0x4, offset = 0, fixed_abs, tag = 'sflag constant byte address 0x0 - dummy sync flag']
  #allocation11 [shape = 's32[]', space=sflag, size = 0x4, offset = 0, fixed_abs, tag = 'sflag constant byte address 0x0 - dummy sync flag']
  #allocation12 [shape = 'u32[]', space=smem, size = 0x4, offset = 0x44, fixed_abs, tag = 'smem constant byte address 0x44 - assertion arg 0']
  #allocation13 [shape = 'u32[]', space=smem, size = 0x4, offset = 0x48, fixed_abs, tag = 'smem constant byte address 0x48 - assertion arg 1']
  #allocation14 [shape = 's32[]', space=sflag, size = 0x4, offset = 0, fixed_abs, tag = 'sflag constant byte address 0x0 - dummy sync flag']
  #allocation15 [shape = 's32[]', space=sflag, size = 0x4, offset = 0, fixed_abs, tag = 'sflag constant byte address 0x0 - dummy sync flag']
  #allocation16 [shape = 's32[]', space=sflag, size = 0x4, offset = 0, fixed_abs, tag = 'sflag constant byte address 0x0 - dummy sync flag']
  #allocation17 [shape = 's32[]', space=sflag, size = 0x4, offset = 0, fixed_abs, tag = 'sflag constant byte address 0x0 - dummy sync flag']
  #allocation18 [shape = 's32[]', space=sflag, size = 0x4, offset = 0, fixed_abs, tag = 'sflag constant byte address 0x0 - dummy sync flag']
  #allocation19 [shape = 's32[]', space=sflag, size = 0x4, offset = 0, fixed_abs, tag = 'sflag constant byte address 0x0 - dummy sync flag']
  #allocation20 [shape = 's32[]', space=sflag, size = 0x4, offset = 0, fixed_abs, tag = 'sflag constant byte address 0x0 - dummy sync flag']
  #allocation21 [shape = 's32[]', space=sflag, size = 0x4, offset = 0, fixed_abs, tag = 'sflag constant byte address 0x0 - dummy sync flag']
  #allocation22 [shape = 's32[]', space=sflag, size = 0x4, offset = 0, fixed_abs, tag = 'sflag constant byte address 0x0 - dummy sync flag']
  #allocation23 [shape = 's32[]', space=sflag, size = 0x4, offset = 0, fixed_abs, tag = 'sflag constant byte address 0x0 - dummy sync flag']
  #allocation24 [shape = 's32[]', space=sflag, size = 0x4, offset = 0, fixed_abs, tag = 'sflag constant byte address 0x0 - dummy sync flag']
  #allocation25 [shape = 's32[]', space=sflag, size = 0x4, offset = 0, fixed_abs, tag = 'sflag constant byte address 0x0 - dummy sync flag']
  #allocation26 [shape = 's32[]', space=sflag, size = 0x4, offset = 0, fixed_abs, tag = 'sflag constant byte address 0x0 - dummy sync flag']
  #allocation27 [shape = 's32[]', space=sflag, size = 0x4, offset = 0, fixed_abs, tag = 'sflag constant byte address 0x0 - dummy sync flag']
  %s0 = inlined_call_operand.hbm [shape: s32[16], index: 0, kind: input, shape index: {}]
  %s1 = inlined_call_operand.hbm [shape: f32[64,128], index: 1, kind: input, shape index: {}]
  %s2 = inlined_call_operand.hbm [shape: f32[8,128], index: 2, kind: input, shape index: {}]
  %s3 = inlined_call_operand.vmem [shape: f32[1,128], index: 3, kind: input, shape index: {}]
  %s4 = inlined_call_operand.vmem [shape: f32[1,128], index: 4, kind: input, shape index: {}]
  %s5 = inlined_call_operand.hbm [shape: f32[16,128], index: 5, kind: output, shape index: {}]
  %s6 = sld [smem:[#allocation0]]
  $region81: #{tpu_custom_call.1} parent=0
    _
  %s8 = ssub.s32 1, %s6
  %s9 = scalar_select 0, %s8, %s6
  %s11 = sshll.u32 %s0, 4
  %s12 = int_to_ptr.hbm [resolvable:$true] %s11
  %14 = dma.hbm_to_smem %s12, 16, [#allocation5], [#allocation4]
  %16 = dma.done [#allocation4], 16
  %17 = sfence
  $region1: #{tpu_custom_call.1} parent=0
    #allocation6 [shape = 'u8[4096]{0}', space=vmem, size = 0x1000, scoped, tag = 'input window, operand 2, single buffered']
    #allocation7 [shape = 's32[2]{0}', space=sflag, size = 0x8, scoped, tag = 'scoped memory for tpu_custom_call.1']
    #allocation8 [shape = 's32[2]{0}', space=sflag, size = 0x8, scoped, tag = 'scoped memory for tpu_custom_call.1']
    #allocation9 [shape = 'u8[8192]{0}', space=vmem, size = 0x2000, scoped, tag = 'output window, operand 0']
    %18 = vsyncpa [#allocation7], 0
    %19 = vsyncpa [#allocation8], 0
    %s20 = scalar_lea.sflag [#allocation8], 1
    %21 = vsyncpa %s20, 0
    loop: start=0, step=1, limit=4
    $region2: #{tpu_custom_call.1} parent=1 // loop_pre_header
      _
    $region3: #{tpu_custom_call.1} parent=1 // loop_header
      %s23 = sphi 0, %s27
      %p24 = scmp.ge.s32.totalorder %s23, 4
      %s31 = sphi 0, %s31
      %s33 = sphi 0, %s31
      %s34 = sphi 0, %s33
      %s48 = sphi 0, %s34
      %s52 = sphi 0, %s52
      %s54 = sphi 0, %s52
      %s55 = sphi 0, %s54
      %s69 = sphi 0, %s55
      %s73 = sphi 0, %s73
      %s75 = sphi 0, %s73
      %s76 = sphi 0, %s75
      %s90 = sphi 0, %s76
      %s96 = sphi 0, %s98
      %s99 = sphi 0, %s96
      %s100 = sphi 0, %s99
      %s116 = sphi 0, %s100
    $region4: #{tpu_custom_call.1} parent=1 // loop_header_branch
      %26 = sbr.rel (%p24) target = $region8
    $region5: #{tpu_custom_call.1} parent=1 // loop_body
      %s28 = ssub.s32 %s23, 1
      %s29 = ssub.s32 %s23, 2
      %s30 = sadd.s32 %s23, 1
      %s32 = sadd.s32 %s31, 1
      %p35 = scmp.eq.s32.totalorder %s23, 1
      %p36 = scmp.ne.s32.totalorder %s31, %s33
      %p37 = scmp.eq.s32.totalorder %s23, 0
      %p38 = por %p36, %p37
      %p39 = scmp.ne.s32.totalorder %s31, %s33
      %p40 = scmp.eq.s32.totalorder %s28, 1
      %p41 = por %p39, %p40
      %p42 = scmp.ne.s32.totalorder %s33, %s34
      %p43 = scmp.eq.s32.totalorder %s28, 0
      %p44 = por %p42, %p43
      %p45 = scmp.ne.s32.totalorder %s33, %s34
      %p46 = scmp.eq.s32.totalorder %s29, 1
      %p47 = por %p45, %p46
      %p49 = scmp.ne.s32.totalorder %s34, %s48
      %p50 = scmp.eq.s32.totalorder %s29, 0
      %p51 = por %p49, %p50
      %s53 = sadd.s32 %s52, 1
      %p56 = scmp.eq.s32.totalorder %s23, 1
      %p57 = scmp.ne.s32.totalorder %s52, %s54
      %p58 = scmp.eq.s32.totalorder %s23, 0
      %p59 = por %p57, %p58
      %p60 = scmp.ne.s32.totalorder %s52, %s54
      %p61 = scmp.eq.s32.totalorder %s28, 1
      %p62 = por %p60, %p61
      %p63 = scmp.ne.s32.totalorder %s54, %s55
      %p64 = scmp.eq.s32.totalorder %s28, 0
      %p65 = por %p63, %p64
      %p66 = scmp.ne.s32.totalorder %s54, %s55
      %p67 = scmp.eq.s32.totalorder %s29, 1
      %p68 = por %p66, %p67
      %p70 = scmp.ne.s32.totalorder %s55, %s69
      %p71 = scmp.eq.s32.totalorder %s29, 0
      %p72 = por %p70, %p71
      %s74 = sadd.s32 %s73, 1
      %p77 = scmp.eq.s32.totalorder %s23, 1
      %p78 = scmp.ne.s32.totalorder %s73, %s75
      %p79 = scmp.eq.s32.totalorder %s23, 0
      %p80 = por %p78, %p79
      %p81 = scmp.ne.s32.totalorder %s73, %s75
      %p82 = scmp.eq.s32.totalorder %s28, 1
      %p83 = por %p81, %p82
      %p84 = scmp.ne.s32.totalorder %s75, %s76
      %p85 = scmp.eq.s32.totalorder %s28, 0
      %p86 = por %p84, %p85
      %p87 = scmp.ne.s32.totalorder %s75, %s76
      %p88 = scmp.eq.s32.totalorder %s29, 1
      %p89 = por %p87, %p88
      %p91 = scmp.ne.s32.totalorder %s76, %s90
      %p92 = scmp.eq.s32.totalorder %s29, 0
      %p93 = por %p91, %p92
      %s94 = ssub.s32 %s23, %s30
      %p95 = scmp.eq.s32.totalorder %s94, 0
      %s97 = sadd.s32 %s96, 1
      %s98 = scalar_select %p95, %s96, %s97
      %p101 = pneg %p95
      %p102 = scmp.eq.s32.totalorder %s23, 1
      %p103 = por %p101, %p102
      %p104 = scmp.ne.s32.totalorder %s96, %s99
      %p105 = scmp.eq.s32.totalorder %s23, 0
      %p106 = por %p104, %p105
      %p107 = scmp.ne.s32.totalorder %s96, %s99
      %p108 = scmp.eq.s32.totalorder %s28, 1
      %p109 = por %p107, %p108
      %p110 = scmp.ne.s32.totalorder %s99, %s100
      %p111 = scmp.eq.s32.totalorder %s28, 0
      %p112 = por %p110, %p111
      %p113 = scmp.ne.s32.totalorder %s99, %s100
      %p114 = scmp.eq.s32.totalorder %s29, 1
      %p115 = por %p113, %p114
      %p117 = scmp.ne.s32.totalorder %s100, %s116
      %p118 = scmp.eq.s32.totalorder %s29, 0
      %p119 = por %p117, %p118
      %p120 = scmp.le.s32.totalorder 1, %s23
      %p121 = scmp.lt.s32.totalorder %s23, 3
      %p122 = pnand %p120, %p121
      %p123 = pneg %p122
      // Predicated region
      $region9: #{tpu_custom_call.1} parent=5 // pred_check
        _
      $region10: #{tpu_custom_call.1} parent=5 // pred_check_branch
        %125 = sbr.rel (%p122) target = $region12
      $region11: #{tpu_custom_call.1} parent=5 // pred_region
        %s126 = ssub.s32 %s23, 1
        // Predicated region
        $region13: #{tpu_custom_call.1} parent=11 // pred_check
          %p127 = pneg %p44
        $region14: #{tpu_custom_call.1} parent=11 // pred_check_branch
          %129 = sbr.rel (%p127) target = $region16
        $region15: #{tpu_custom_call.1} parent=11 // pred_region
          %131 = vsyncadd [#allocation7], 0
          %s133 = sshll.u32 %s2, 4
          %s134 = int_to_ptr.hbm [resolvable:$true] %s133
          %s135 = sshll.u32 [#allocation6], 4
          %s136 = int_to_ptr.vmem [resolvable:$true] %s135
          %138 = dma.hbm_to_vmem [thread:$0]  %s134, 128, %s136, [#allocation7]
        $region16: #{tpu_custom_call.1} parent=11 // pred_fallthru
          _
        // Predicated region
        $region17: #{tpu_custom_call.1} parent=11 // pred_check
          %p139 = pneg %p65
        $region18: #{tpu_custom_call.1} parent=11 // pred_check_branch
          %141 = sbr.rel (%p139) target = $region20
        $region19: #{tpu_custom_call.1} parent=11 // pred_region
          _
        $region20: #{tpu_custom_call.1} parent=11 // pred_fallthru
          _
        // Predicated region
        $region21: #{tpu_custom_call.1} parent=11 // pred_check
          %p142 = pneg %p86
        $region22: #{tpu_custom_call.1} parent=11 // pred_check_branch
          %144 = sbr.rel (%p142) target = $region24
        $region23: #{tpu_custom_call.1} parent=11 // pred_region
          _
        $region24: #{tpu_custom_call.1} parent=11 // pred_fallthru
          _
      $region12: #{tpu_custom_call.1} parent=5 // pred_fallthru
        _
      %p145 = scmp.lt.s32.totalorder %s23, 2
      // Predicated region
      $region25: #{tpu_custom_call.1} parent=5 // pred_check
        %p146 = pneg %p145
      $region26: #{tpu_custom_call.1} parent=5 // pred_check_branch
        %148 = sbr.rel (%p146) target = $region28
      $region27: #{tpu_custom_call.1} parent=5 // pred_region
        _
      $region28: #{tpu_custom_call.1} parent=5 // pred_fallthru
        _
      %p149 = scmp.le.s32.totalorder 1, %s23
      %p150 = scmp.lt.s32.totalorder %s23, 3
      %p151 = pnand %p149, %p150
      %p152 = pneg %p151
      // Predicated region
      $region29: #{tpu_custom_call.1} parent=5 // pred_check
        _
      $region30: #{tpu_custom_call.1} parent=5 // pred_check_branch
        %154 = sbr.rel (%p151) target = $region32
      $region31: #{tpu_custom_call.1} parent=5 // pred_region
        %s155 = ssub.s32 %s23, 1
        // Predicated region
        $region33: #{tpu_custom_call.1} parent=31 // pred_check
          %p156 = pneg %p44
        $region34: #{tpu_custom_call.1} parent=31 // pred_check_branch
          %158 = sbr.rel (%p156) target = $region36
        $region35: #{tpu_custom_call.1} parent=31 // pred_region
          %160 = dma.done [#allocation7], 128
        $region36: #{tpu_custom_call.1} parent=31 // pred_fallthru
          _
        %p161 = pneg %p44
        %p162 = pneg %p41
        %p163 = pneg %p65
        %p164 = pneg %p62
        %p165 = pneg %p86
        %p166 = pneg %p83
        %p167 = pneg %p112
        %p168 = pneg %p109
        %s169 = sand.u32 %s99, 1
        %s170 = scalar_lea.sflag [#allocation8], %s169
        %s171 = sand.u32 %s99, 1
        %s172 = smul.addr %s171, 8
        %s173 = scalar_lea.vmem [#allocation9], %s172
        %s174 = smul.u32 %s28, 8
        %s175 = sld [smem:[#allocation5 + %s174]]
        %s176 = scalar_lea.hbm %s1, %s175
        // Predicated region
        $region37: #{tpu_custom_call.1} parent=31 // pred_check
          _
        $region38: #{tpu_custom_call.1} parent=31 // pred_check_branch
          %178 = sbr.rel target = $region40
        $region39: #{tpu_custom_call.1} parent=31 // pred_region
          %179 = sst [smem:[#allocation12]] [#allocation11]
          %180 = sst [smem:[#allocation13]] [#allocation10]
        $region40: #{tpu_custom_call.1} parent=31 // pred_fallthru
          _
        %182 = shalt.err (0)
        %s184 = sshll.u32 %s176, 4
        %s185 = int_to_ptr.hbm [resolvable:$true] %s184
        %s186 = sshll.u32 [#allocation2], 4
        %s187 = int_to_ptr.vmem [resolvable:$true] %s186
        %189 = dma.hbm_to_vmem [thread:$0]  %s185, 16, %s187, [#allocation3]
        %s190 = sadd.s32 %s174, 1
        %s191 = sld [smem:[#allocation5 + %s190]]
        %s192 = scalar_lea.hbm %s1, %s191
        %s193 = scalar_lea.vmem [#allocation2], 1
        %s194 = scalar_lea.sflag [#allocation3], 1
        // Predicated region
        $region41: #{tpu_custom_call.1} parent=31 // pred_check
          _
        $region42: #{tpu_custom_call.1} parent=31 // pred_check_branch
          %196 = sbr.rel target = $region44
        $region43: #{tpu_custom_call.1} parent=31 // pred_region
          %197 = sst [smem:[#allocation12]] [#allocation15]
          %198 = sst [smem:[#allocation13]] [#allocation14]
        $region44: #{tpu_custom_call.1} parent=31 // pred_fallthru
          _
        %200 = shalt.err (0)
        %s202 = sshll.u32 %s192, 4
        %s203 = int_to_ptr.hbm [resolvable:$true] %s202
        %s204 = sshll.u32 %s193, 4
        %s205 = int_to_ptr.vmem [resolvable:$true] %s204
        %207 = dma.hbm_to_vmem [thread:$0]  %s203, 16, %s205, %s194
        %s208 = sadd.s32 %s174, 2
        %s209 = sld [smem:[#allocation5 + %s208]]
        %s210 = scalar_lea.hbm %s1, %s209
        %s211 = scalar_lea.vmem [#allocation2], 2
        %s212 = scalar_lea.sflag [#allocation3], 2
        // Predicated region
        $region45: #{tpu_custom_call.1} parent=31 // pred_check
          _
        $region46: #{tpu_custom_call.1} parent=31 // pred_check_branch
          %214 = sbr.rel target = $region48
        $region47: #{tpu_custom_call.1} parent=31 // pred_region
          %215 = sst [smem:[#allocation12]] [#allocation17]
          %216 = sst [smem:[#allocation13]] [#allocation16]
        $region48: #{tpu_custom_call.1} parent=31 // pred_fallthru
          _
        %218 = shalt.err (0)
        %s220 = sshll.u32 %s210, 4
        %s221 = int_to_ptr.hbm [resolvable:$true] %s220
        %s222 = sshll.u32 %s211, 4
        %s223 = int_to_ptr.vmem [resolvable:$true] %s222
        %225 = dma.hbm_to_vmem [thread:$0]  %s221, 16, %s223, %s212
        %s226 = sadd.s32 %s174, 3
        %s227 = sld [smem:[#allocation5 + %s226]]
        %s228 = scalar_lea.hbm %s1, %s227
        %s229 = scalar_lea.vmem [#allocation2], 3
        %s230 = scalar_lea.sflag [#allocation3], 3
        // Predicated region
        $region49: #{tpu_custom_call.1} parent=31 // pred_check
          _
        $region50: #{tpu_custom_call.1} parent=31 // pred_check_branch
          %232 = sbr.rel target = $region52
        $region51: #{tpu_custom_call.1} parent=31 // pred_region
          %233 = sst [smem:[#allocation12]] [#allocation19]
          %234 = sst [smem:[#allocation13]] [#allocation18]
        $region52: #{tpu_custom_call.1} parent=31 // pred_fallthru
          _
        %236 = shalt.err (0)
        %s238 = sshll.u32 %s228, 4
        %s239 = int_to_ptr.hbm [resolvable:$true] %s238
        %s240 = sshll.u32 %s229, 4
        %s241 = int_to_ptr.vmem [resolvable:$true] %s240
        %243 = dma.hbm_to_vmem [thread:$0]  %s239, 16, %s241, %s230
        %s244 = sadd.s32 %s174, 4
        %s245 = sld [smem:[#allocation5 + %s244]]
        %s246 = scalar_lea.hbm %s1, %s245
        %s247 = scalar_lea.vmem [#allocation2], 4
        %s248 = scalar_lea.sflag [#allocation3], 4
        // Predicated region
        $region53: #{tpu_custom_call.1} parent=31 // pred_check
          _
        $region54: #{tpu_custom_call.1} parent=31 // pred_check_branch
          %250 = sbr.rel target = $region56
        $region55: #{tpu_custom_call.1} parent=31 // pred_region
          %251 = sst [smem:[#allocation12]] [#allocation21]
          %252 = sst [smem:[#allocation13]] [#allocation20]
        $region56: #{tpu_custom_call.1} parent=31 // pred_fallthru
          _
        %254 = shalt.err (0)
        %s256 = sshll.u32 %s246, 4
        %s257 = int_to_ptr.hbm [resolvable:$true] %s256
        %s258 = sshll.u32 %s247, 4
        %s259 = int_to_ptr.vmem [resolvable:$true] %s258
        %261 = dma.hbm_to_vmem [thread:$0]  %s257, 16, %s259, %s248
        %s262 = sadd.s32 %s174, 5
        %s263 = sld [smem:[#allocation5 + %s262]]
        %s264 = scalar_lea.hbm %s1, %s263
        %s265 = scalar_lea.vmem [#allocation2], 5
        %s266 = scalar_lea.sflag [#allocation3], 5
        // Predicated region
        $region57: #{tpu_custom_call.1} parent=31 // pred_check
          _
        $region58: #{tpu_custom_call.1} parent=31 // pred_check_branch
          %268 = sbr.rel target = $region60
        $region59: #{tpu_custom_call.1} parent=31 // pred_region
          %269 = sst [smem:[#allocation12]] [#allocation23]
          %270 = sst [smem:[#allocation13]] [#allocation22]
        $region60: #{tpu_custom_call.1} parent=31 // pred_fallthru
          _
        %272 = shalt.err (0)
        %s274 = sshll.u32 %s264, 4
        %s275 = int_to_ptr.hbm [resolvable:$true] %s274
        %s276 = sshll.u32 %s265, 4
        %s277 = int_to_ptr.vmem [resolvable:$true] %s276
        %279 = dma.hbm_to_vmem [thread:$0]  %s275, 16, %s277, %s266
        %s280 = sadd.s32 %s174, 6
        %s281 = sld [smem:[#allocation5 + %s280]]
        %s282 = scalar_lea.hbm %s1, %s281
        %s283 = scalar_lea.vmem [#allocation2], 6
        %s284 = scalar_lea.sflag [#allocation3], 6
        // Predicated region
        $region61: #{tpu_custom_call.1} parent=31 // pred_check
          _
        $region62: #{tpu_custom_call.1} parent=31 // pred_check_branch
          %286 = sbr.rel target = $region64
        $region63: #{tpu_custom_call.1} parent=31 // pred_region
          %287 = sst [smem:[#allocation12]] [#allocation25]
          %288 = sst [smem:[#allocation13]] [#allocation24]
        $region64: #{tpu_custom_call.1} parent=31 // pred_fallthru
          _
        %290 = shalt.err (0)
        %s292 = sshll.u32 %s282, 4
        %s293 = int_to_ptr.hbm [resolvable:$true] %s292
        %s294 = sshll.u32 %s283, 4
        %s295 = int_to_ptr.vmem [resolvable:$true] %s294
        %297 = dma.hbm_to_vmem [thread:$0]  %s293, 16, %s295, %s284
        %s298 = sadd.s32 %s174, 7
        %s299 = sld [smem:[#allocation5 + %s298]]
        %s300 = scalar_lea.hbm %s1, %s299
        %s301 = scalar_lea.vmem [#allocation2], 7
        %s302 = scalar_lea.sflag [#allocation3], 7
        // Predicated region
        $region65: #{tpu_custom_call.1} parent=31 // pred_check
          _
        $region66: #{tpu_custom_call.1} parent=31 // pred_check_branch
          %304 = sbr.rel target = $region68
        $region67: #{tpu_custom_call.1} parent=31 // pred_region
          %305 = sst [smem:[#allocation12]] [#allocation27]
          %306 = sst [smem:[#allocation13]] [#allocation26]
        $region68: #{tpu_custom_call.1} parent=31 // pred_fallthru
          _
        %308 = shalt.err (0)
        %s310 = sshll.u32 %s300, 4
        %s311 = int_to_ptr.hbm [resolvable:$true] %s310
        %s312 = sshll.u32 %s301, 4
        %s313 = int_to_ptr.vmem [resolvable:$true] %s312
        %315 = dma.hbm_to_vmem [thread:$0]  %s311, 16, %s313, %s302
        %v316 = vld [vmem:[%s3] sm:$0x1]
        %v317 = vld [vmem:[%s4] sm:$0x1]
        %s318 = smul.u32 1, 1
        %s319 = sshll.u32 %s318, 4
        %320 = dma.done [#allocation3], %s319
        %s321 = sshll.u32 %s318, 4
        %322 = dma.done %s194, %s321
        %s323 = sshll.u32 %s318, 4
        %324 = dma.done %s212, %s323
        %s325 = sshll.u32 %s318, 4
        %326 = dma.done %s230, %s325
        %s327 = sshll.u32 %s318, 4
        %328 = dma.done %s248, %s327
        %s329 = sshll.u32 %s318, 4
        %330 = dma.done %s266, %s329
        %s331 = sshll.u32 %s318, 4
        %332 = dma.done %s284, %s331
        %s333 = sshll.u32 %s318, 4
        %334 = dma.done %s302, %s333
        %v335 = vld [vmem:[#allocation2] sm:$0xff]
        %v336 = vld [vmem:[#allocation6] sm:$0xff]
        %v337 = vadd.f32 %v335, %v336
        %338 = vadd.xlane.f32.xlu0 %v337
        %v339 = vpop.xlane.xlu0 %338
        %v340 = vmul.f32 %v337, %v337
        %341 = vadd.xlane.f32.xlu0 %v340
        %v342 = vpop.xlane.xlu0 %341
        %v343 = vmul.f32 %v339, 0.03125
        %v344 = vmul.f32 %v342, 0.03125
        %v345 = vmul.f32 %v343, %v343
        %v346 = vsub.f32 %v344, %v345
        %v347 = vmax.f32 %v346, 0.0
        %v348 = vadd.f32 %v347, 1e-05
        %v349 = vrsqrt.pop %v348
        %v350 = vmul.f32 %v349, %v348
        %v351 = vmul.f32 %v350, %v349
        %v352 = vmul.f32 0.5, %v351
        %v353 = vsub.f32 1.5, %v352
        %v354 = vmul.f32 %v349, %v353
        %vm355 = vweird.f32 %v348
        %vm356 = vweird.f32 %v349
        %vm357 = vmor %vm355, %vm356
        %v358 = vsel %vm357, %v349, %v354
        %v359 = vsub.f32 %v337, %v343
        %v360 = vmul.f32 %v359, %v358
        %v362 = vperm.slane %v316, 0
        %v364 = vmul.f32 %v360, %v362
        %v366 = vperm.slane %v317, 0
        %v368 = vadd.f32 %v364, %v366
        %369 = vst [vmem:[%s173] sm:$0xff] %v368
        %s370 = sand.u32 %s99, 1
        %s371 = scalar_lea.sflag [#allocation8], %s370
        %s372 = sand.u32 %s99, 1
        %s373 = smul.addr %s372, 8
        %s374 = scalar_lea.vmem [#allocation9], %s373
        // Predicated region
        $region69: #{tpu_custom_call.1} parent=31 // pred_check
          %p375 = pneg %p109
        $region70: #{tpu_custom_call.1} parent=31 // pred_check_branch
          %377 = sbr.rel (%p375) target = $region72
        $region71: #{tpu_custom_call.1} parent=31 // pred_region
          %379 = vsyncadd %s371, 0
          %s380 = smul.addr %s28, 8
          %s381 = scalar_lea.hbm %s5, %s380
          %s383 = sshll.u32 %s374, 4
          %s384 = int_to_ptr.vmem [resolvable:$true] %s383
          %s385 = sshll.u32 %s381, 4
          %s386 = int_to_ptr.hbm [resolvable:$true] %s385
          %388 = dma.vmem_to_hbm [thread:$0]  %s384, 128, %s386, %s371
        $region72: #{tpu_custom_call.1} parent=31 // pred_fallthru
          _
      $region32: #{tpu_custom_call.1} parent=5 // pred_fallthru
        _
      %p389 = scmp.le.s32.totalorder 2, %s23
      // Predicated region
      $region73: #{tpu_custom_call.1} parent=5 // pred_check
        %p390 = pneg %p389
      $region74: #{tpu_custom_call.1} parent=5 // pred_check_branch
        %392 = sbr.rel (%p390) target = $region76
      $region75: #{tpu_custom_call.1} parent=5 // pred_region
        %s393 = ssub.s32 %s23, 2
        // Predicated region
        $region77: #{tpu_custom_call.1} parent=75 // pred_check
          %p394 = pneg %p115
        $region78: #{tpu_custom_call.1} parent=75 // pred_check_branch
          %396 = sbr.rel (%p394) target = $region80
        $region79: #{tpu_custom_call.1} parent=75 // pred_region
          %s397 = sand.u32 %s100, 1
          %s398 = scalar_lea.sflag [#allocation8], %s397
          %s399 = sand.u32 %s100, 1
          %s400 = smul.addr %s399, 8
          %s401 = scalar_lea.vmem [#allocation9], %s400
          %403 = dma.done %s398, 128
        $region80: #{tpu_custom_call.1} parent=75 // pred_fallthru
          _
      $region76: #{tpu_custom_call.1} parent=5 // pred_fallthru
        _
    $region6: #{tpu_custom_call.1} parent=1 // loop_footer
      %s27 = sadd.s32 1, %s23
    $region7: #{tpu_custom_call.1} parent=1 // loop_footer_branch
      %22 = sbr.rel target = $region3
    $region8: #{tpu_custom_call.1} parent=1 // loop_exit
      _
    %404 = vsyncpa [#allocation7], 1
    %s405 = scalar_lea.sflag [#allocation7], 1
    %406 = vsyncpa %s405, 1
    %407 = vsyncpa [#allocation8], 1
    %s408 = scalar_lea.sflag [#allocation8], 1
    %409 = vsyncpa %s408, 1
  %410 = vsyncmov [#allocation3]
  %s411 = vpop.sfrf %410
  %p412 = scmp.eq.s32.totalorder %s411, 0
  %p413 = pneg %p412
  %415 = shalt.err (%p413)
  %s416 = scalar_lea.sflag [#allocation3], 1
  %417 = vsyncmov %s416
  %s418 = vpop.sfrf %417
  %p419 = scmp.eq.s32.totalorder %s418, 0
  %p420 = pneg %p419
  %422 = shalt.err (%p420)
  %s423 = scalar_lea.sflag [#allocation3], 2
  %424 = vsyncmov %s423
  %s425 = vpop.sfrf %424
  %p426 = scmp.eq.s32.totalorder %s425, 0
  %p427 = pneg %p426
  %429 = shalt.err (%p427)
  %s430 = scalar_lea.sflag [#allocation3], 3
  %431 = vsyncmov %s430
  %s432 = vpop.sfrf %431
  %p433 = scmp.eq.s32.totalorder %s432, 0
  %p434 = pneg %p433
  %436 = shalt.err (%p434)
  %s437 = scalar_lea.sflag [#allocation3], 4
  %438 = vsyncmov %s437
  %s439 = vpop.sfrf %438
  %p440 = scmp.eq.s32.totalorder %s439, 0
  %p441 = pneg %p440
  %443 = shalt.err (%p441)
  %s444 = scalar_lea.sflag [#allocation3], 5
  %445 = vsyncmov %s444
  %s446 = vpop.sfrf %445
  %p447 = scmp.eq.s32.totalorder %s446, 0
  %p448 = pneg %p447
  %450 = shalt.err (%p448)
  %s451 = scalar_lea.sflag [#allocation3], 6
  %452 = vsyncmov %s451
  %s453 = vpop.sfrf %452
  %p454 = scmp.eq.s32.totalorder %s453, 0
  %p455 = pneg %p454
  %457 = shalt.err (%p455)
  %s458 = scalar_lea.sflag [#allocation3], 7
  %459 = vsyncmov %s458
  %s460 = vpop.sfrf %459
  %p461 = scmp.eq.s32.totalorder %s460, 0
  %p462 = pneg %p461
  %464 = shalt.err (%p462)
  %s465 = scalar_lea.sflag [#allocation3], 8
  %466 = vsyncmov %s465
  %s467 = vpop.sfrf %466
  %p468 = scmp.eq.s32.totalorder %s467, 0
  %p469 = pneg %p468
  %471 = shalt.err (%p469)
  %s472 = scalar_lea.sflag [#allocation3], 9
  %473 = vsyncmov %s472
  %s474 = vpop.sfrf %473
  %p475 = scmp.eq.s32.totalorder %s474, 0
  %p476 = pneg %p475
  %478 = shalt.err (%p476)
  %s479 = scalar_lea.sflag [#allocation3], 10
  %480 = vsyncmov %s479
  %s481 = vpop.sfrf %480
  %p482 = scmp.eq.s32.totalorder %s481, 0
  %p483 = pneg %p482
  %485 = shalt.err (%p483)
  %s486 = scalar_lea.sflag [#allocation3], 11
  %487 = vsyncmov %s486
  %s488 = vpop.sfrf %487
  %p489 = scmp.eq.s32.totalorder %s488, 0
  %p490 = pneg %p489
  %492 = shalt.err (%p490)
  %s493 = scalar_lea.sflag [#allocation3], 12
  %494 = vsyncmov %s493
  %s495 = vpop.sfrf %494
  %p496 = scmp.eq.s32.totalorder %s495, 0
  %p497 = pneg %p496
  %499 = shalt.err (%p497)
  %s500 = scalar_lea.sflag [#allocation3], 13
  %501 = vsyncmov %s500
  %s502 = vpop.sfrf %501
  %p503 = scmp.eq.s32.totalorder %s502, 0
  %p504 = pneg %p503
  %506 = shalt.err (%p504)
  %s507 = scalar_lea.sflag [#allocation3], 14
  %508 = vsyncmov %s507
  %s509 = vpop.sfrf %508
  %p510 = scmp.eq.s32.totalorder %s509, 0
  %p511 = pneg %p510
  %513 = shalt.err (%p511)
  %s514 = scalar_lea.sflag [#allocation3], 15
  %515 = vsyncmov %s514
  %s516 = vpop.sfrf %515
  %p517 = scmp.eq.s32.totalorder %s516, 0
  %p518 = pneg %p517
  %520 = shalt.err (%p518)

</llo_original>
